<compile_context>
chip_gen: v7x
topology: tpu7x:2x2x1
jax: 0.10.0
libtpu: 0.0.40
codegen_flags: <defaults>
</compile_context>

<pallas_src>
import jax
import jax.numpy as jnp
from jax.experimental import pallas as pl
from jax.experimental.pallas import tpu as pltpu


MAX_TILE_B = 512  # mem-bound sweet spot; big enough to amortize per-step overhead


def _round_up(x: int, m: int) -> int:
    return (x + m - 1) // m * m


def _proj_score_kernel(q_ref, e_ref, w_ref, b_ref, o_ref):
    # (tile_b, D_in) bf16 @ (D_in, D_in) bf16 on the MXU, f32 accumulate.
    m = jnp.dot(q_ref[...], w_ref[...], preferred_element_type=jnp.float32)
    # Row-wise multiply by e (cast up to f32: v5e VPU has no bf16) and lane-reduce.
    e = e_ref[...].astype(jnp.float32)
    row = jnp.sum(m * e, axis=-1) + b_ref[0, 0]          # (tile_b,)
    # Lane-dense store: one (1, tile_b) row slab per grid step.
    o_ref[...] = row[None, :].astype(o_ref.dtype)


def prepare_params(params):
    """Fold the classifier into the bilinear weight. Do this ONCE at load time.

    params (torch shapes):
      'W'  : (D_out, D_in, D_in)  bilinear weight
      'b1' : (D_out,)             bilinear bias
      'w2' : (1, D_out)           classifier weight
      'b2' : (1,)                 classifier bias
    """
    w2_row = params["w2"][0]                                        # (D_out,)
    # Fold in f32, then store bf16 (halves HBM/VMEM traffic, 4x MXU rate on v6e/v7x).
    w_eff = jnp.einsum("oij,o->ij", params["W"].astype(jnp.float32),
                       w2_row.astype(jnp.float32))                  # (D_in, D_in)
    bias_eff = jnp.dot(params["b1"].astype(jnp.float32), w2_row.astype(jnp.float32))
    bias_eff = bias_eff + params["b2"][0].astype(jnp.float32)
    return {
        "W_eff": w_eff.astype(jnp.bfloat16),
        "bias_eff": bias_eff.reshape(1, 1).astype(jnp.float32),
    }


def projection_score_forward(query_emb, entity_emb, packed):
    """packed: output of prepare_params. Returns (B, 1) f32 scores."""
    B, D_in = query_emb.shape

    # Fixed large batch tile + cdiv grid: never a single giant block, edge
    # block is handled (masked) by Pallas, and multi-step grids let v7x's two
    # TensorCores split the "parallel" axis.
    tile_b = min(MAX_TILE_B, _round_up(B, 8))
    grid_n = pl.cdiv(B, tile_b)

    q = query_emb.astype(jnp.bfloat16)
    e = entity_emb.astype(jnp.bfloat16)
    w_eff = packed["W_eff"]
    bias = packed["bias_eff"]

    # Advisory cost estimate (bf16 inputs/weights, f32 output).
    flops = 2 * B * D_in * D_in + 2 * B * D_in
    bytes_accessed = 2 * (2 * B * D_in) + 2 * D_in * D_in + 4 * B + 4
    cost = pl.CostEstimate(flops=flops, transcendentals=0,
                           bytes_accessed=bytes_accessed)

    # Explicit scoped-VMEM budget: q/e double-buffered bf16 tiles, W_eff
    # single-buffered, out double-buffered f32 (v5e default scoped limit is
    # only 16 MiB, so size it ourselves).
    vmem_need = (2 * 2 * tile_b * D_in * 2      # q, e: double-buffered bf16
                 + D_in * D_in * 2              # W_eff: single-buffered bf16
                 + 2 * tile_b * 4)              # out: double-buffered f32
    vmem_limit = int(min(64 * 1024 * 1024,
                         max(8 * 1024 * 1024, 2 * vmem_need + (2 << 20))))

    # TODO(synk): for very large D_in on v7x (64 MiB VMEM/TC), add a
    # K-reduction grid axis over D_in chunks ("arbitrary", last) with an f32
    # scratch accumulator and pl.when init/finalize so W_eff never has to be
    # fully resident.
    out2d = pl.pallas_call(
        _proj_score_kernel,
        out_shape=jax.ShapeDtypeStruct((grid_n, tile_b), jnp.float32),
        grid=(grid_n,),
        in_specs=[
            pl.BlockSpec((tile_b, D_in), lambda i: (i, 0)),          # q
            pl.BlockSpec((tile_b, D_in), lambda i: (i, 0)),          # e
            pl.BlockSpec((D_in, D_in), lambda i: (0, 0),             # W_eff (resident,
                         pipeline_mode=pl.Buffered(1)),              #  single-buffered)
            pl.BlockSpec(memory_space=pltpu.MemorySpace.SMEM),       # bias scalar
        ],
        out_specs=pl.BlockSpec((1, tile_b), lambda i: (i, 0)),       # lane-dense slab
        compiler_params=pltpu.CompilerParams(
            dimension_semantics=("parallel",),
            vmem_limit_bytes=vmem_limit),
        cost_estimate=cost,
    )(q, e, w_eff, bias)

    # (grid_n, tile_b) -> (B, 1); padded tail rows (if any) are dropped.
    return out2d.reshape(-1)[:B].reshape(B, 1)


def _reference(query_emb, entity_emb, params):
    # Pure-JAX f32 reference matching torch.nn.Bilinear + nn.Linear semantics.
    z = jnp.einsum("bi,oij,bj->bo", query_emb, params["W"], entity_emb) + params["b1"]
    return z @ params["w2"].T + params["b2"]


if __name__ == "__main__":
    B = 8
    input_emb_dim = 32
    output_emb_dim = 16

    key = jax.random.PRNGKey(0)
    kq, ke, kw, kb1, kw2, kb2 = jax.random.split(key, 6)

    query_emb = jax.random.normal(kq, (B, input_emb_dim), dtype=jnp.float32)
    entity_emb = jax.random.normal(ke, (B, input_emb_dim), dtype=jnp.float32)

    # Deterministic parameter init (uniform, roughly torch's default scale).
    bound1 = 1.0 / (input_emb_dim ** 0.5)
    bound2 = 1.0 / (output_emb_dim ** 0.5)
    params = {
        "W": jax.random.uniform(kw, (output_emb_dim, input_emb_dim, input_emb_dim),
                                minval=-bound1, maxval=bound1, dtype=jnp.float32),
        "b1": jax.random.uniform(kb1, (output_emb_dim,),
                                 minval=-bound1, maxval=bound1, dtype=jnp.float32),
        "w2": jax.random.uniform(kw2, (1, output_emb_dim),
                                 minval=-bound2, maxval=bound2, dtype=jnp.float32),
        "b2": jax.random.uniform(kb2, (1,),
                                 minval=-bound2, maxval=bound2, dtype=jnp.float32),
    }

    # Parameter folding happens once, outside the per-call forward path.
    packed = jax.tree_util.tree_map(jax.block_until_ready, prepare_params(params))

    out = projection_score_forward(query_emb, entity_emb, packed)
    out = jax.block_until_ready(out)

    ref = _reference(query_emb, entity_emb, params)
    assert out.shape == (B, 1), out.shape
    # bf16 weights/activations with f32 accumulation: relaxed tolerance vs the
    # pure-f32 torch-semantics reference.
    assert jnp.allclose(out, ref, atol=5e-2, rtol=5e-2), (out, ref)
    print("KERNEL_OK")
</pallas_src>

<mosaic_0001>
module attributes {stable_mosaic.version = 11 : i64} {
  func.func @_proj_score_kernel(%arg0: i32, %arg1: memref<8x32xbf16, #tpu.memory_space<vmem>>, %arg2: memref<8x32xbf16, #tpu.memory_space<vmem>>, %arg3: memref<32x32xbf16, #tpu.memory_space<vmem>>, %arg4: memref<1x1xf32, #tpu.memory_space<smem>>, %arg5: memref<1x8xf32, #tpu.memory_space<vmem>>) attributes {dimension_semantics = [#tpu.dimension_semantics<parallel>], iteration_bounds = array<i64: 1>, scalar_prefetch = 0 : i64, scratch_operands = 0 : i64, tpu.core_type = #tpu.core_type<tc>, window_params = [{transform_indices = @transform_0, window_bounds = array<i64: 8, 32>}, {transform_indices = @transform_1, window_bounds = array<i64: 8, 32>}, {pipeline_mode = #tpu.pipeline_mode<synchronous>, transform_indices = @transform_2, window_bounds = array<i64: 32, 32>}, {transform_indices = @transform_3, window_bounds = array<i64: 1, 1>}, {transform_indices = @transform_4, window_bounds = array<i64: 1, 8>}]} {
    %c0 = arith.constant 0 : index
    %c0_0 = arith.constant 0 : index
    %0 = vector.load %arg1[%c0, %c0_0] : memref<8x32xbf16, #tpu.memory_space<vmem>>, vector<8x32xbf16>
    %c0_1 = arith.constant 0 : index
    %c0_2 = arith.constant 0 : index
    %1 = vector.load %arg3[%c0_1, %c0_2] : memref<32x32xbf16, #tpu.memory_space<vmem>>, vector<32x32xbf16>
    %cst = arith.constant dense<0.000000e+00> : vector<8x32xf32>
    %2 = tpu.matmul %0, %1, %cst {dimension_numbers = #tpu.dot_dimension_numbers<[1], [0], [0], [1], [0, 0, 1, 1], [], []>} : vector<8x32xbf16>, vector<32x32xbf16>, vector<8x32xf32> -> vector<8x32xf32>
    %c0_3 = arith.constant 0 : index
    %c0_4 = arith.constant 0 : index
    %3 = vector.load %arg2[%c0_3, %c0_4] : memref<8x32xbf16, #tpu.memory_space<vmem>>, vector<8x32xbf16>
    %4 = arith.extf %3 : vector<8x32xbf16> to vector<8x32xf32>
    %5 = arith.mulf %2, %4 : vector<8x32xf32>
    %cst_5 = arith.constant dense<0.000000e+00> : vector<8xf32>
    %6 = vector.multi_reduction <add>, %5, %cst_5 [1] : vector<8x32xf32> to vector<8xf32>
    %c0_6 = arith.constant 0 : index
    %c0_7 = arith.constant 0 : index
    %7 = memref.load %arg4[%c0_6, %c0_7] : memref<1x1xf32, #tpu.memory_space<smem>>
    %8 = vector.broadcast %7 : f32 to vector<8xf32>
    %9 = arith.addf %6, %8 : vector<8xf32>
    %10 = vector.shape_cast %9 : vector<8xf32> to vector<1x8xf32>
    %c0_8 = arith.constant 0 : index
    %c0_9 = arith.constant 0 : index
    %11 = vector.load %arg5[%c0_8, %c0_9] : memref<1x8xf32, #tpu.memory_space<vmem>>, vector<1x8xf32>
    tpu.vector_store %arg5[%c0_8, %c0_9], %10 {strides = array<i32>} : memref<1x8xf32, #tpu.memory_space<vmem>>, vector<1x8xf32>,
    return
  }
  func.func @transform_0(%arg0: i32) -> (i32, i32) {
    %c0_i32 = arith.constant 0 : i32
    %c0_i32_0 = arith.constant 0 : i32
    return %arg0, %c0_i32 : i32, i32
  }
  func.func @transform_1(%arg0: i32) -> (i32, i32) {
    %c0_i32 = arith.constant 0 : i32
    %c0_i32_0 = arith.constant 0 : i32
    return %arg0, %c0_i32 : i32, i32
  }
  func.func @transform_2(%arg0: i32) -> (i32, i32) {
    %c0_i32 = arith.constant 0 : i32
    %c0_i32_0 = arith.constant 0 : i32
    %c0_i32_1 = arith.constant 0 : i32
    return %c0_i32, %c0_i32_0 : i32, i32
  }
  func.func @transform_3(%arg0: i32) -> (i32, i32) {
    %c0_i32 = arith.constant 0 : i32
    %c0_i32_0 = arith.constant 0 : i32
    %c0_i32_1 = arith.constant 0 : i32
    return %c0_i32, %c0_i32_0 : i32, i32
  }
  func.func @transform_4(%arg0: i32) -> (i32, i32) {
    %c0_i32 = arith.constant 0 : i32
    %c0_i32_0 = arith.constant 0 : i32
    return %arg0, %c0_i32 : i32, i32
  }
}

</mosaic_0001>

<llo_original>
// kernel: tpu_custom_call.1
$region0: #{tpu_custom_call.1}
  #allocation0 [shape = 'u32[]', space=smem, size = 0x4, offset = 0x4, fixed_abs, tag = 'smem constant byte address 0x4 - core index']
  #allocation1 [shape = 'u32[144,128]{1,0:T(1,128)}', space=vmem, size = 0x12000, scoped, tag = 'internal scratch']
  #allocation2 [shape = 'f32[1,1]{1,0:T(1,128)S(6)}', space=smem, size = 0x200, scoped, tag = 'scoped memory for tpu_custom_call.1']
  %s0 = inlined_call_operand.hbm [shape: bf16[8,32], index: 0, kind: input, shape index: {}]
  %s1 = inlined_call_operand.vmem [shape: bf16[8,32], index: 1, kind: input, shape index: {}]
  %s2 = inlined_call_operand.hbm [shape: bf16[32,32], index: 2, kind: input, shape index: {}]
  %s3 = inlined_call_operand.<no memory space> [shape: f32[1,1], index: 3, kind: input, shape index: {}]
  %s4 = inlined_call_operand.hbm [shape: f32[1,8], index: 4, kind: output, shape index: {}]
  %s5 = sld [smem:[#allocation0]]
  $region34: #{tpu_custom_call.1} parent=0
    _
  %s7 = ssub.s32 1, %s5
  %s8 = scalar_select 0, %s7, %s5
  %9 = sst [smem:[#allocation2]] %s3
  $region1: #{tpu_custom_call.1} parent=0
    #allocation3 [shape = 'u8[2048]{0}', space=vmem, size = 0x800, scoped, tag = 'input window, operand 0, single buffered']
    #allocation4 [shape = 's32[1]{0}', space=sflag, size = 0x4, scoped, tag = 'scoped memory for tpu_custom_call.1']
    #allocation5 [shape = 's32[1]{0}', space=sflag, size = 0x4, scoped, tag = 'scoped memory for tpu_custom_call.1']
    #allocation6 [shape = 'u8[8192]{0}', space=vmem, size = 0x2000, scoped, tag = 'input window, operand 2, single buffered']
    #allocation7 [shape = 's32[1]{0}', space=sflag, size = 0x4, scoped, tag = 'scoped memory for tpu_custom_call.1']
    #allocation8 [shape = 'u8[512]{0}', space=vmem, size = 0x400, scoped, tag = 'output window, operand 0, single buffered']
    %10 = vsyncpa [#allocation4], 0
    %11 = vsyncpa [#allocation7], 0
    %12 = vsyncpa [#allocation5], 0
    // Predicated region
    $region2: #{tpu_custom_call.1} parent=1 // pred_check
      _
    $region3: #{tpu_custom_call.1} parent=1 // pred_check_branch
      %14 = sbr.rel (0) target = $region5
    $region4: #{tpu_custom_call.1} parent=1 // pred_region
      %s16 = ssub.s32 64, 64
      %17 = vsyncadd [#allocation4], %s16
      %s19 = sshll.u32 [#allocation3], 4
      %s20 = int_to_ptr.vmem [resolvable:$true] %s19
      %22 = dma.hbm_to_vmem [thread:$0]  %s0, 64, %s20, [#allocation4]
    $region5: #{tpu_custom_call.1} parent=1 // pred_fallthru
      _
    // Predicated region
    $region6: #{tpu_custom_call.1} parent=1 // pred_check
      _
    $region7: #{tpu_custom_call.1} parent=1 // pred_check_branch
      %24 = sbr.rel (0) target = $region9
    $region8: #{tpu_custom_call.1} parent=1 // pred_region
      _
    $region9: #{tpu_custom_call.1} parent=1 // pred_fallthru
      _
    // Predicated region
    $region10: #{tpu_custom_call.1} parent=1 // pred_check
      _
    $region11: #{tpu_custom_call.1} parent=1 // pred_check_branch
      %26 = sbr.rel (0) target = $region13
    $region12: #{tpu_custom_call.1} parent=1 // pred_region
      %s28 = ssub.s32 256, 256
      %29 = vsyncadd [#allocation7], %s28
      %s30 = sshll.u32 [#allocation6], 4
      %s31 = int_to_ptr.vmem [resolvable:$true] %s30
      %36 = dma.hbm_to_vmem [thread:$0]  %s2, 256, %s31, [#allocation7], 64, 64, 4
    $region13: #{tpu_custom_call.1} parent=1 // pred_fallthru
      _
    // Predicated region
    $region14: #{tpu_custom_call.1} parent=1 // pred_check
      _
    $region15: #{tpu_custom_call.1} parent=1 // pred_check_branch
      %38 = sbr.rel (0) target = $region17
    $region16: #{tpu_custom_call.1} parent=1 // pred_region
      _
    $region17: #{tpu_custom_call.1} parent=1 // pred_fallthru
      _
    // Predicated region
    $region18: #{tpu_custom_call.1} parent=1 // pred_check
      _
    $region19: #{tpu_custom_call.1} parent=1 // pred_check_branch
      %40 = sbr.rel (0) target = $region21
    $region20: #{tpu_custom_call.1} parent=1 // pred_region
      %41 = dma.done [#allocation4], 64
    $region21: #{tpu_custom_call.1} parent=1 // pred_fallthru
      _
    // Predicated region
    $region22: #{tpu_custom_call.1} parent=1 // pred_check
      _
    $region23: #{tpu_custom_call.1} parent=1 // pred_check_branch
      %43 = sbr.rel (0) target = $region25
    $region24: #{tpu_custom_call.1} parent=1 // pred_region
      %44 = dma.done [#allocation7], 256
    $region25: #{tpu_custom_call.1} parent=1 // pred_fallthru
      _
    %v46 = vld [vmem:[#allocation3] sm:$0xf]
    %v47 = vld [vmem:[#allocation6] sm:$0xf]
    %v48 = vld [vmem:[#allocation6 + $0x4] sm:$0xf]
    %v49 = vld [vmem:[#allocation6 + $0x8] sm:$0xf]
    %v50 = vld [vmem:[#allocation6 + $0xc] sm:$0xf]
    %v55 = vunpack.c.l.b16 %v47
    %v56 = vunpack.c.l.b16 %v48
    %v57 = vunpack.c.l.b16 %v49
    %v58 = vunpack.c.l.b16 %v50
    %v59 = vpack.c.b16 %v56, %v55
    %v60 = vpack.c.b16 %v58, %v57
    %vm63 = vcmask 261120
    %v65 = vsel %vm63, %v46, 0
    %67 = vmatprep.subr.bf16.mxu0 0
    %68 = vmatpush1.bf16.msra.mxu0 %v59
    %69 = vmatprep.subr.bf16.mxu0 0
    %70 = vmatpush1.bf16.msra.mxu0 %v60
    %71 = vmatprep.subr.bf16.mxu0 0
    %72 = vmatpush1.bf16.msra.mxu0 0
    %73 = vmatprep.subr.bf16.mxu0 0
    %74 = vmatpush1.bf16.msra.mxu0 0
    %75 = vmatprep.subr.bf16.mxu0 0
    %76 = vmatpush1.bf16.msra.mxu0 0
    %77 = vmatprep.subr.bf16.mxu0 0
    %78 = vmatpush1.bf16.msra.mxu0 0
    %79 = vmatprep.subr.bf16.mxu0 0
    %80 = vmatpush1.bf16.msra.mxu0 0
    %81 = vmatprep.subr.bf16.mxu0 0
    %82 = vmatpush1.bf16.msra.mxu0 0
    %83 = vmatprep.subr.bf16.mxu0 0
    %84 = vmatpush1.bf16.msra.mxu0 0
    %85 = vmatprep.subr.bf16.mxu0 0
    %86 = vmatpush1.bf16.msra.mxu0 0
    %87 = vmatprep.subr.bf16.mxu0 0
    %88 = vmatpush1.bf16.msra.mxu0 0
    %89 = vmatprep.subr.bf16.mxu0 0
    %90 = vmatpush1.bf16.msra.mxu0 0
    %91 = vmatprep.subr.bf16.mxu0 0
    %92 = vmatpush1.bf16.msra.mxu0 0
    %93 = vmatprep.subr.bf16.mxu0 0
    %94 = vmatpush1.bf16.msra.mxu0 0
    %95 = vmatprep.subr.bf16.mxu0 0
    %96 = vmatpush1.bf16.msra.mxu0 0
    %97 = vmatprep.subr.bf16.mxu0 0
    %98 = vmatpush1.bf16.msra.mxu0 0
    %99 = vmatprep.mubr.bf16.mxu0 0
    %100 = vmatmul.mubr.bf16.gmra.mrb[0].mxu0 %v65
    %v101 = vpop.f32.mrb[0].mxu0
    %v102 = vadd.f32 0.0, %v101
    %v103 = vpop.f32.mrb[0].mxu0
    %v104 = vpop.f32.mrb[0].mxu0
    %v105 = vpop.f32.mrb[0].mxu0
    %106 = vdwg.mxu0
    %v107 = vld [vmem:[%s1] sm:$0xf]
    %v108 = vunpack.c.l.bf16 %v107
    %v109 = vmul.f32 %v102, %v108
    %v110 = vsel %vm63, %v109, 0.0
    %111 = vadd.xlane.f32.xlu0 %v110
    %v112 = vpop.xlane.xlu0 %111
    %s113 = sld [smem:[#allocation2]]
    %v114 = vstv %s113
    %v115 = vadd.f32 %v112, %v114
    %v117 = vlaneseq
    %v118 = vand.u32 %v117, 127
    %v119 = vlaneseq
    %v120 = vshrl.u32 %v119, 7
    %v121 = vsub.s32 %v118, %v120
    %v122 = vrot.slane %v115, %v121
    %vm124 = vcmask 57344
    %125 = vst.msk [vmem:[#allocation8] sm:$0x1] %vm124, %v122
    // Predicated region
    $region26: #{tpu_custom_call.1} parent=1 // pred_check
      _
    $region27: #{tpu_custom_call.1} parent=1 // pred_check_branch
      %127 = sbr.rel (0) target = $region29
    $region28: #{tpu_custom_call.1} parent=1 // pred_region
      %s129 = ssub.s32 16, 16
      %130 = vsyncadd [#allocation5], %s129
      %s132 = sshll.u32 [#allocation8], 4
      %s133 = int_to_ptr.vmem [resolvable:$true] %s132
      %135 = dma.vmem_to_hbm [thread:$0]  %s133, 16, %s4, [#allocation5]
    $region29: #{tpu_custom_call.1} parent=1 // pred_fallthru
      _
    // Predicated region
    $region30: #{tpu_custom_call.1} parent=1 // pred_check
      _
    $region31: #{tpu_custom_call.1} parent=1 // pred_check_branch
      %137 = sbr.rel (0) target = $region33
    $region32: #{tpu_custom_call.1} parent=1 // pred_region
      %138 = dma.done [#allocation5], 16
    $region33: #{tpu_custom_call.1} parent=1 // pred_fallthru
      _
    %139 = vsyncpa [#allocation4], 1
    %140 = vsyncpa [#allocation7], 1
    %141 = vsyncpa [#allocation5], 1

</llo_original>
